<compile_context>
chip_gen: v5e
topology: v5e:2x2
jax: 0.10.0
libtpu: 0.0.40
codegen_flags: <defaults>
</compile_context>

<pallas_src>
import jax
import jax.numpy as jnp
from jax.experimental import pallas as pl
from jax.experimental.pallas import tpu as pltpu

IN_FEATURES = 28 * 28   # 784
HIDDEN = 128
OUT_FEATURES = 10
OUT_PAD = 128           # lane-dense padded output width


def _round_up(x, m):
    return ((x + m - 1) // m) * m


def _on_v7x():
    try:
        return "v7" in jax.devices()[0].device_kind.lower()
    except Exception:
        return False


def mlp_kernel(x_ref, w1_ref, b1_ref, w2_ref, b2_ref, o_ref):
    # x_ref: (TB, 784) producer dtype (bf16 or f32), w1_ref: (784, 128) bf16,
    # b1_ref: (1, 128) f32, w2_ref: (128, 128) bf16 (cols 10..127 zero),
    # b2_ref: (1, 128) f32, o_ref: (TB, 128) f32.
    xb = x_ref[...].astype(jnp.bfloat16)             # no-op if producer is bf16
    h = jnp.dot(xb, w1_ref[...], preferred_element_type=jnp.float32)
    h = jnp.maximum(h + b1_ref[...], 0.0)            # f32 epilogue (ReLU) on VPU
    out = jnp.dot(h.astype(jnp.bfloat16), w2_ref[...],
                  preferred_element_type=jnp.float32)
    o_ref[...] = (out + b2_ref[...]).astype(o_ref.dtype)


def prepare_params(w1, b1, w2, b2):
    """One-time weight prep (hoisted out of the forward per perf review).

    w1: (784, 128), b1: (128,), w2: (128, 10), b2: (10,)  (in, out layout).
    Returns bf16 weights / f32 biases with layer 2 padded to a lane-dense
    N=128 output.
    """
    w1_b = w1.astype(jnp.bfloat16)                                    # (784, 128)
    b1_2d = b1.reshape(1, HIDDEN).astype(jnp.float32)                 # (1, 128)
    w2_p = jnp.zeros((HIDDEN, OUT_PAD), jnp.bfloat16).at[:, :OUT_FEATURES].set(
        w2.astype(jnp.bfloat16))                                      # (128, 128)
    b2_p = jnp.zeros((1, OUT_PAD), jnp.float32).at[:, :OUT_FEATURES].set(
        b2.astype(jnp.float32))                                       # (1, 128)
    return w1_b, b1_2d, w2_p, b2_p


def simple_nn_forward(x, params, *, tb=1024):
    """Forward pass of SimpleNN.

    x: any shape flattening to (B, 784) rows (e.g. (B, 1, 28, 28)); bf16 or f32.
       Feeding bf16 halves the dominant HBM stream (the in-kernel cast is free).
    params: output of prepare_params(w1, b1, w2, b2).
    Returns logits of shape (B, 10), float32.
    """
    w1_b, b1_2d, w2_p, b2_p = params
    x2d = x.reshape(-1, IN_FEATURES)     # free reshape, no pad / no cast pass
    B = x2d.shape[0]

    # Batch tile: multiple of 16 sublanes (covers f32 and bf16 x), capped at tb.
    # NOTE: the x tile occupies ceil(784/128)*128 = 896 lanes in VMEM (~+14%);
    # we do NOT pad IN_FEATURES in HBM -- that would inflate the dominant stream.
    tb_eff = min(tb, _round_up(B, 16))

    on_v7x = _on_v7x()
    if on_v7x and B >= 32:
        # Ensure >= 2 grid steps so both v7x TensorCores (and both HBM paths)
        # get work, then shard the batch axis across cores.
        tb_eff = min(tb_eff, _round_up(pl.cdiv(B, 2), 16))

    grid_b = pl.cdiv(B, tb_eff)          # ragged trailing block handled by Pallas
    if on_v7x and grid_b >= 2:
        batch_sem = pltpu.CORE_PARALLEL
    else:
        batch_sem = "parallel"

    out_padded = pl.pallas_call(
        mlp_kernel,
        out_shape=jax.ShapeDtypeStruct((B, OUT_PAD), jnp.float32),
        grid=(grid_b,),
        in_specs=[
            pl.BlockSpec((tb_eff, IN_FEATURES), lambda i: (i, 0)),   # x streams
            pl.BlockSpec((IN_FEATURES, HIDDEN), lambda i: (0, 0)),   # w1 resident
            pl.BlockSpec((1, HIDDEN), lambda i: (0, 0)),             # b1 resident
            pl.BlockSpec((HIDDEN, OUT_PAD), lambda i: (0, 0)),       # w2 resident
            pl.BlockSpec((1, OUT_PAD), lambda i: (0, 0)),            # b2 resident
        ],
        out_specs=pl.BlockSpec((tb_eff, OUT_PAD), lambda i: (i, 0)),
        compiler_params=pltpu.CompilerParams(
            dimension_semantics=(batch_sem,),
            # No vmem_limit_bytes: ~8-9 MiB needed at tb=1024 fits every
            # generation's default scoped limit (never request full v7x VMEM).
        ),
    )(x2d, w1_b, b1_2d, w2_p, b2_p)

    # Strip the lane padding of the 10-wide logits (no batch padding to strip).
    return out_padded[:, :OUT_FEATURES]


def init_params(key):
    """nn.Linear-style U(-1/sqrt(fan_in), 1/sqrt(fan_in)) init.

    Weights are stored transposed relative to PyTorch as (in, out) so the
    kernel computes x @ W directly.
    """
    k1, k2, k3, k4 = jax.random.split(key, 4)
    bound1 = 1.0 / jnp.sqrt(float(IN_FEATURES))
    bound2 = 1.0 / jnp.sqrt(float(HIDDEN))
    w1 = jax.random.uniform(k1, (IN_FEATURES, HIDDEN), jnp.float32, -bound1, bound1)
    b1 = jax.random.uniform(k2, (HIDDEN,), jnp.float32, -bound1, bound1)
    w2 = jax.random.uniform(k3, (HIDDEN, OUT_FEATURES), jnp.float32, -bound2, bound2)
    b2 = jax.random.uniform(k4, (OUT_FEATURES,), jnp.float32, -bound2, bound2)
    return w1, b1, w2, b2


def _reference(x, w1, b1, w2, b2):
    x2d = x.reshape(-1, IN_FEATURES).astype(jnp.float32)
    return jnp.maximum(x2d @ w1 + b1, 0.0) @ w2 + b2


if __name__ == "__main__":
    key = jax.random.PRNGKey(0)
    kx, kp, kx2 = jax.random.split(key, 3)
    w1, b1, w2, b2 = init_params(kp)
    params = prepare_params(w1, b1, w2, b2)   # one-time weight prep

    # Small MNIST-like batch, bf16 producer path (halves the dominant HBM stream).
    x = jax.random.normal(kx, (2, 1, 28, 28), dtype=jnp.float32).astype(jnp.bfloat16)
    out = jax.block_until_ready(simple_nn_forward(x, params))
    ref = _reference(x, w1, b1, w2, b2)
    assert out.shape == (2, OUT_FEATURES)
    # bf16 matmul inputs -> looser tolerance than pure f32.
    assert jnp.allclose(out, ref, atol=5e-2, rtol=5e-2)

    # Non-divisible f32 batch: exercises the no-pad ragged trailing block path.
    x_big = jax.random.normal(kx2, (300, 1, 28, 28), dtype=jnp.float32)
    out_big = jax.block_until_ready(simple_nn_forward(x_big, params, tb=128))
    ref_big = _reference(x_big, w1, b1, w2, b2)
    assert out_big.shape == (300, OUT_FEATURES)
    assert jnp.allclose(out_big, ref_big, atol=5e-2, rtol=5e-2)

    print("KERNEL_OK")
</pallas_src>

<mosaic_0001>
module attributes {stable_mosaic.version = 11 : i64} {
  func.func @mlp_kernel(%arg0: i32, %arg1: memref<16x784xbf16, #tpu.memory_space<vmem>>, %arg2: memref<784x128xbf16, #tpu.memory_space<vmem>>, %arg3: memref<1x128xf32, #tpu.memory_space<vmem>>, %arg4: memref<128x128xbf16, #tpu.memory_space<vmem>>, %arg5: memref<1x128xf32, #tpu.memory_space<vmem>>, %arg6: memref<16x128xf32, #tpu.memory_space<vmem>>) attributes {dimension_semantics = [#tpu.dimension_semantics<parallel>], iteration_bounds = array<i64: 1>, scalar_prefetch = 0 : i64, scratch_operands = 0 : i64, tpu.core_type = #tpu.core_type<tc>, window_params = [{transform_indices = @transform_0, window_bounds = array<i64: 16, 784>}, {pipeline_mode = #tpu.pipeline_mode<synchronous>, transform_indices = @transform_1, window_bounds = array<i64: 784, 128>}, {pipeline_mode = #tpu.pipeline_mode<synchronous>, transform_indices = @transform_2, window_bounds = array<i64: 1, 128>}, {pipeline_mode = #tpu.pipeline_mode<synchronous>, transform_indices = @transform_3, window_bounds = array<i64: 128, 128>}, {pipeline_mode = #tpu.pipeline_mode<synchronous>, transform_indices = @transform_4, window_bounds = array<i64: 1, 128>}, {transform_indices = @transform_5, window_bounds = array<i64: 16, 128>}]} {
    %c0 = arith.constant 0 : index
    %c0_0 = arith.constant 0 : index
    %0 = vector.load %arg1[%c0, %c0_0] : memref<16x784xbf16, #tpu.memory_space<vmem>>, vector<16x784xbf16>
    %c0_1 = arith.constant 0 : index
    %c0_2 = arith.constant 0 : index
    %1 = vector.load %arg2[%c0_1, %c0_2] : memref<784x128xbf16, #tpu.memory_space<vmem>>, vector<784x128xbf16>
    %cst = arith.constant dense<0.000000e+00> : vector<16x128xf32>
    %2 = tpu.matmul %0, %1, %cst {dimension_numbers = #tpu.dot_dimension_numbers<[1], [0], [0], [1], [0, 0, 1, 1], [], []>} : vector<16x784xbf16>, vector<784x128xbf16>, vector<16x128xf32> -> vector<16x128xf32>
    %c0_3 = arith.constant 0 : index
    %c0_4 = arith.constant 0 : index
    %3 = vector.load %arg3[%c0_3, %c0_4] : memref<1x128xf32, #tpu.memory_space<vmem>>, vector<1x128xf32>
    %4 = vector.broadcast %3 : vector<1x128xf32> to vector<16x128xf32>
    %5 = arith.addf %2, %4 : vector<16x128xf32>
    %cst_5 = arith.constant 0.000000e+00 : f32
    %6 = vector.broadcast %cst_5 : f32 to vector<16x128xf32>
    %7 = arith.maximumf %5, %6 : vector<16x128xf32>
    %8 = arith.truncf %7 : vector<16x128xf32> to vector<16x128xbf16>
    %c0_6 = arith.constant 0 : index
    %c0_7 = arith.constant 0 : index
    %9 = vector.load %arg4[%c0_6, %c0_7] : memref<128x128xbf16, #tpu.memory_space<vmem>>, vector<128x128xbf16>
    %cst_8 = arith.constant dense<0.000000e+00> : vector<16x128xf32>
    %10 = tpu.matmul %8, %9, %cst_8 {dimension_numbers = #tpu.dot_dimension_numbers<[1], [0], [0], [1], [0, 0, 1, 1], [], []>} : vector<16x128xbf16>, vector<128x128xbf16>, vector<16x128xf32> -> vector<16x128xf32>
    %c0_9 = arith.constant 0 : index
    %c0_10 = arith.constant 0 : index
    %11 = vector.load %arg5[%c0_9, %c0_10] : memref<1x128xf32, #tpu.memory_space<vmem>>, vector<1x128xf32>
    %12 = vector.broadcast %11 : vector<1x128xf32> to vector<16x128xf32>
    %13 = arith.addf %10, %12 : vector<16x128xf32>
    %c0_11 = arith.constant 0 : index
    %c0_12 = arith.constant 0 : index
    %14 = vector.load %arg6[%c0_11, %c0_12] : memref<16x128xf32, #tpu.memory_space<vmem>>, vector<16x128xf32>
    tpu.vector_store %arg6[%c0_11, %c0_12], %13 {strides = array<i32>} : memref<16x128xf32, #tpu.memory_space<vmem>>, vector<16x128xf32>,
    return
  }
  func.func @transform_0(%arg0: i32) -> (i32, i32) {
    %c0_i32 = arith.constant 0 : i32
    %c0_i32_0 = arith.constant 0 : i32
    return %arg0, %c0_i32 : i32, i32
  }
  func.func @transform_1(%arg0: i32) -> (i32, i32) {
    %c0_i32 = arith.constant 0 : i32
    %c0_i32_0 = arith.constant 0 : i32
    %c0_i32_1 = arith.constant 0 : i32
    return %c0_i32, %c0_i32_0 : i32, i32
  }
  func.func @transform_2(%arg0: i32) -> (i32, i32) {
    %c0_i32 = arith.constant 0 : i32
    %c0_i32_0 = arith.constant 0 : i32
    %c0_i32_1 = arith.constant 0 : i32
    return %c0_i32, %c0_i32_0 : i32, i32
  }
  func.func @transform_3(%arg0: i32) -> (i32, i32) {
    %c0_i32 = arith.constant 0 : i32
    %c0_i32_0 = arith.constant 0 : i32
    %c0_i32_1 = arith.constant 0 : i32
    return %c0_i32, %c0_i32_0 : i32, i32
  }
  func.func @transform_4(%arg0: i32) -> (i32, i32) {
    %c0_i32 = arith.constant 0 : i32
    %c0_i32_0 = arith.constant 0 : i32
    %c0_i32_1 = arith.constant 0 : i32
    return %c0_i32, %c0_i32_0 : i32, i32
  }
  func.func @transform_5(%arg0: i32) -> (i32, i32) {
    %c0_i32 = arith.constant 0 : i32
    %c0_i32_0 = arith.constant 0 : i32
    return %arg0, %c0_i32 : i32, i32
  }
}

</mosaic_0001>

<llo_original>
// kernel: tpu_custom_call.1
$region0: #{tpu_custom_call.1}
  #allocation0 [shape = 'u32[]', space=smem, size = 0x4, offset = 0x4, fixed_abs, tag = 'smem constant byte address 0x4 - core index']
  #allocation1 [shape = 'u32[72,128]{1,0:T(1,128)}', space=vmem, size = 0x9000, scoped, tag = 'internal scratch']
  %s0 = inlined_call_operand.hbm [shape: bf16[2,784], index: 0, kind: input, shape index: {}]
  %s1 = inlined_call_operand.hbm [shape: bf16[784,128], index: 1, kind: input, shape index: {}]
  %s2 = inlined_call_operand.vmem [shape: f32[1,128], index: 2, kind: input, shape index: {}]
  %s3 = inlined_call_operand.hbm [shape: bf16[128,128], index: 3, kind: input, shape index: {}]
  %s4 = inlined_call_operand.vmem [shape: f32[1,128], index: 4, kind: input, shape index: {}]
  %s5 = inlined_call_operand.hbm [shape: f32[2,128], index: 5, kind: output, shape index: {}]
  %s6 = sld [smem:[#allocation0]]
  $region42: #{tpu_custom_call.1} parent=0
    _
  %s8 = ssub.s32 1, %s6
  %s9 = scalar_select 0, %s8, %s6
  $region1: #{tpu_custom_call.1} parent=0
    #allocation2 [shape = 'u8[28672]{0}', space=vmem, size = 0x7000, scoped, tag = 'input window, operand 0, single buffered']
    #allocation3 [shape = 's32[1]{0}', space=sflag, size = 0x4, scoped, tag = 'scoped memory for tpu_custom_call.1']
    #allocation4 [shape = 's32[1]{0}', space=sflag, size = 0x4, scoped, tag = 'scoped memory for tpu_custom_call.1']
    #allocation5 [shape = 'u8[200704]{0}', space=vmem, size = 0x31000, scoped, tag = 'input window, operand 1, single buffered']
    #allocation6 [shape = 's32[1]{0}', space=sflag, size = 0x4, scoped, tag = 'scoped memory for tpu_custom_call.1']
    #allocation7 [shape = 'u8[32768]{0}', space=vmem, size = 0x8000, scoped, tag = 'input window, operand 3, single buffered']
    #allocation8 [shape = 'u8[8192]{0}', space=vmem, size = 0x2000, scoped, tag = 'output window, operand 0, single buffered']
    %10 = vsyncpa [#allocation3], 0
    %11 = vsyncpa [#allocation6], 0
    %12 = vsyncpa [#allocation4], 0
    // Predicated region
    $region2: #{tpu_custom_call.1} parent=1 // pred_check
      _
    $region3: #{tpu_custom_call.1} parent=1 // pred_check_branch
      %14 = sbr.rel (0) target = $region5
    $region4: #{tpu_custom_call.1} parent=1 // pred_region
      %16 = vsyncadd [#allocation3], 784
      %s17 = sshll.u32 %s0, 4
      %s18 = int_to_ptr.hbm [resolvable:$true] %s17
      %s19 = sshll.u32 [#allocation2], 4
      %s20 = int_to_ptr.vmem [resolvable:$true] %s19
      %25 = dma.hbm_to_vmem [thread:$0]  %s18, 112, %s20, [#allocation3], 112, 112, 7
    $region5: #{tpu_custom_call.1} parent=1 // pred_fallthru
      _
    // Predicated region
    $region6: #{tpu_custom_call.1} parent=1 // pred_check
      _
    $region7: #{tpu_custom_call.1} parent=1 // pred_check_branch
      %27 = sbr.rel (0) target = $region9
    $region8: #{tpu_custom_call.1} parent=1 // pred_region
      %29 = vsyncadd [#allocation6], 0
      %s30 = sshll.u32 %s1, 4
      %s31 = int_to_ptr.hbm [resolvable:$true] %s30
      %s32 = sshll.u32 [#allocation5], 4
      %s33 = int_to_ptr.vmem [resolvable:$true] %s32
      %38 = dma.hbm_to_vmem [thread:$0]  %s31, 6272, %s33, [#allocation6], 64, 64, 4
    $region9: #{tpu_custom_call.1} parent=1 // pred_fallthru
      _
    // Predicated region
    $region10: #{tpu_custom_call.1} parent=1 // pred_check
      _
    $region11: #{tpu_custom_call.1} parent=1 // pred_check_branch
      %40 = sbr.rel (0) target = $region13
    $region12: #{tpu_custom_call.1} parent=1 // pred_region
      _
    $region13: #{tpu_custom_call.1} parent=1 // pred_fallthru
      _
    // Predicated region
    $region14: #{tpu_custom_call.1} parent=1 // pred_check
      _
    $region15: #{tpu_custom_call.1} parent=1 // pred_check_branch
      %42 = sbr.rel (0) target = $region17
    $region16: #{tpu_custom_call.1} parent=1 // pred_region
      %44 = vsyncadd [#allocation6], 0
      %s45 = sshll.u32 %s3, 4
      %s46 = int_to_ptr.hbm [resolvable:$true] %s45
      %s47 = sshll.u32 [#allocation7], 4
      %s48 = int_to_ptr.vmem [resolvable:$true] %s47
      %53 = dma.hbm_to_vmem [thread:$0]  %s46, 1024, %s48, [#allocation6], 64, 64, 4
    $region17: #{tpu_custom_call.1} parent=1 // pred_fallthru
      _
    // Predicated region
    $region18: #{tpu_custom_call.1} parent=1 // pred_check
      _
    $region19: #{tpu_custom_call.1} parent=1 // pred_check_branch
      %55 = sbr.rel (0) target = $region21
    $region20: #{tpu_custom_call.1} parent=1 // pred_region
      _
    $region21: #{tpu_custom_call.1} parent=1 // pred_fallthru
      _
    // Predicated region
    $region22: #{tpu_custom_call.1} parent=1 // pred_check
      _
    $region23: #{tpu_custom_call.1} parent=1 // pred_check_branch
      %57 = sbr.rel (0) target = $region25
    $region24: #{tpu_custom_call.1} parent=1 // pred_region
      %59 = dma.done [#allocation3], 896
    $region25: #{tpu_custom_call.1} parent=1 // pred_fallthru
      _
    // Predicated region
    $region26: #{tpu_custom_call.1} parent=1 // pred_check
      _
    $region27: #{tpu_custom_call.1} parent=1 // pred_check_branch
      %61 = sbr.rel (0) target = $region29
    $region28: #{tpu_custom_call.1} parent=1 // pred_region
      %63 = dma.done [#allocation6], 6272
    $region29: #{tpu_custom_call.1} parent=1 // pred_fallthru
      _
    // Predicated region
    $region30: #{tpu_custom_call.1} parent=1 // pred_check
      _
    $region31: #{tpu_custom_call.1} parent=1 // pred_check_branch
      %65 = sbr.rel (0) target = $region33
    $region32: #{tpu_custom_call.1} parent=1 // pred_region
      %67 = dma.done [#allocation6], 1024
    $region33: #{tpu_custom_call.1} parent=1 // pred_fallthru
      _
    %v69 = vld [vmem:[#allocation2] sm:$0x7f]
    %v70 = vld [vmem:[#allocation2 + $0x7] sm:$0x7f]
    %v71 = vld [vmem:[#allocation2 + $0xe] sm:$0x7f]
    %v72 = vld [vmem:[#allocation2 + $0x15] sm:$0x7f]
    %v73 = vld [vmem:[#allocation2 + $0x1c] sm:$0x7f]
    %v74 = vld [vmem:[#allocation2 + $0x23] sm:$0x7f]
    %v75 = vld [vmem:[#allocation2 + $0x2a] sm:$0x7f]
    %v76 = vld [vmem:[#allocation2 + $0x31] sm:$0x7f]
    %v77 = vld [vmem:[#allocation5] sm:$0xf]
    %v78 = vld [vmem:[#allocation5 + $0x4] sm:$0xf]
    %v79 = vld [vmem:[#allocation5 + $0x8] sm:$0xf]
    %v80 = vld [vmem:[#allocation5 + $0xc] sm:$0xf]
    %v81 = vld [vmem:[#allocation5 + $0x10] sm:$0xf]
    %v82 = vld [vmem:[#allocation5 + $0x14] sm:$0xf]
    %v83 = vld [vmem:[#allocation5 + $0x18] sm:$0xf]
    %v84 = vld [vmem:[#allocation5 + $0x1c] sm:$0xf]
    %v85 = vld [vmem:[#allocation5 + $0x20] sm:$0xf]
    %v86 = vld [vmem:[#allocation5 + $0x24] sm:$0xf]
    %v87 = vld [vmem:[#allocation5 + $0x28] sm:$0xf]
    %v88 = vld [vmem:[#allocation5 + $0x2c] sm:$0xf]
    %v89 = vld [vmem:[#allocation5 + $0x30] sm:$0xf]
    %v90 = vld [vmem:[#allocation5 + $0x34] sm:$0xf]
    %v91 = vld [vmem:[#allocation5 + $0x38] sm:$0xf]
    %v92 = vld [vmem:[#allocation5 + $0x3c] sm:$0xf]
    %v93 = vld [vmem:[#allocation5 + $0x40] sm:$0xf]
    %v94 = vld [vmem:[#allocation5 + $0x44] sm:$0xf]
    %v95 = vld [vmem:[#allocation5 + $0x48] sm:$0xf]
    %v96 = vld [vmem:[#allocation5 + $0x4c] sm:$0xf]
    %v97 = vld [vmem:[#allocation5 + $0x50] sm:$0xf]
    %v98 = vld [vmem:[#allocation5 + $0x54] sm:$0xf]
    %v99 = vld [vmem:[#allocation5 + $0x58] sm:$0xf]
    %v100 = vld [vmem:[#allocation5 + $0x5c] sm:$0xf]
    %v101 = vld [vmem:[#allocation5 + $0x60] sm:$0xf]
    %v102 = vld [vmem:[#allocation5 + $0x64] sm:$0xf]
    %v103 = vld [vmem:[#allocation5 + $0x68] sm:$0xf]
    %v104 = vld [vmem:[#allocation5 + $0x6c] sm:$0xf]
    %v105 = vld [vmem:[#allocation5 + $0x70] sm:$0xf]
    %v106 = vld [vmem:[#allocation5 + $0x74] sm:$0xf]
    %v107 = vld [vmem:[#allocation5 + $0x78] sm:$0xf]
    %v108 = vld [vmem:[#allocation5 + $0x7c] sm:$0xf]
    %v109 = vld [vmem:[#allocation5 + $0x80] sm:$0xf]
    %v110 = vld [vmem:[#allocation5 + $0x84] sm:$0xf]
    %v111 = vld [vmem:[#allocation5 + $0x88] sm:$0xf]
    %v112 = vld [vmem:[#allocation5 + $0x8c] sm:$0xf]
    %v113 = vld [vmem:[#allocation5 + $0x90] sm:$0xf]
    %v114 = vld [vmem:[#allocation5 + $0x94] sm:$0xf]
    %v115 = vld [vmem:[#allocation5 + $0x98] sm:$0xf]
    %v116 = vld [vmem:[#allocation5 + $0x9c] sm:$0xf]
    %v117 = vld [vmem:[#allocation5 + $0xa0] sm:$0xf]
    %v118 = vld [vmem:[#allocation5 + $0xa4] sm:$0xf]
    %v119 = vld [vmem:[#allocation5 + $0xa8] sm:$0xf]
    %v120 = vld [vmem:[#allocation5 + $0xac] sm:$0xf]
    %v121 = vld [vmem:[#allocation5 + $0xb0] sm:$0xf]
    %v122 = vld [vmem:[#allocation5 + $0xb4] sm:$0xf]
    %v123 = vld [vmem:[#allocation5 + $0xb8] sm:$0xf]
    %v124 = vld [vmem:[#allocation5 + $0xbc] sm:$0xf]
    %v125 = vld [vmem:[#allocation5 + $0xc0] sm:$0xf]
    %v126 = vld [vmem:[#allocation5 + $0xc4] sm:$0xf]
    %v127 = vld [vmem:[#allocation5 + $0xc8] sm:$0xf]
    %v128 = vld [vmem:[#allocation5 + $0xcc] sm:$0xf]
    %v129 = vld [vmem:[#allocation5 + $0xd0] sm:$0xf]
    %v130 = vld [vmem:[#allocation5 + $0xd4] sm:$0xf]
    %v131 = vld [vmem:[#allocation5 + $0xd8] sm:$0xf]
    %v132 = vld [vmem:[#allocation5 + $0xdc] sm:$0xf]
    %v133 = vld [vmem:[#allocation5 + $0xe0] sm:$0xf]
    %v134 = vld [vmem:[#allocation5 + $0xe4] sm:$0xf]
    %v135 = vld [vmem:[#allocation5 + $0xe8] sm:$0xf]
    %v136 = vld [vmem:[#allocation5 + $0xec] sm:$0xf]
    %v137 = vld [vmem:[#allocation5 + $0xf0] sm:$0xf]
    %v138 = vld [vmem:[#allocation5 + $0xf4] sm:$0xf]
    %v139 = vld [vmem:[#allocation5 + $0xf8] sm:$0xf]
    %v140 = vld [vmem:[#allocation5 + $0xfc] sm:$0xf]
    %v141 = vld [vmem:[#allocation5 + $0x100] sm:$0xf]
    %v142 = vld [vmem:[#allocation5 + $0x104] sm:$0xf]
    %v143 = vld [vmem:[#allocation5 + $0x108] sm:$0xf]
    %v144 = vld [vmem:[#allocation5 + $0x10c] sm:$0xf]
    %v145 = vld [vmem:[#allocation5 + $0x110] sm:$0xf]
    %v146 = vld [vmem:[#allocation5 + $0x114] sm:$0xf]
    %v147 = vld [vmem:[#allocation5 + $0x118] sm:$0xf]
    %v148 = vld [vmem:[#allocation5 + $0x11c] sm:$0xf]
    %v149 = vld [vmem:[#allocation5 + $0x120] sm:$0xf]
    %v150 = vld [vmem:[#allocation5 + $0x124] sm:$0xf]
    %v151 = vld [vmem:[#allocation5 + $0x128] sm:$0xf]
    %v152 = vld [vmem:[#allocation5 + $0x12c] sm:$0xf]
    %v153 = vld [vmem:[#allocation5 + $0x130] sm:$0xf]
    %v154 = vld [vmem:[#allocation5 + $0x134] sm:$0xf]
    %v155 = vld [vmem:[#allocation5 + $0x138] sm:$0xf]
    %v156 = vld [vmem:[#allocation5 + $0x13c] sm:$0xf]
    %v157 = vld [vmem:[#allocation5 + $0x140] sm:$0xf]
    %v158 = vld [vmem:[#allocation5 + $0x144] sm:$0xf]
    %v159 = vld [vmem:[#allocation5 + $0x148] sm:$0xf]
    %v160 = vld [vmem:[#allocation5 + $0x14c] sm:$0xf]
    %v161 = vld [vmem:[#allocation5 + $0x150] sm:$0xf]
    %v162 = vld [vmem:[#allocation5 + $0x154] sm:$0xf]
    %v163 = vld [vmem:[#allocation5 + $0x158] sm:$0xf]
    %v164 = vld [vmem:[#allocation5 + $0x15c] sm:$0xf]
    %v165 = vld [vmem:[#allocation5 + $0x160] sm:$0xf]
    %v166 = vld [vmem:[#allocation5 + $0x164] sm:$0xf]
    %v167 = vld [vmem:[#allocation5 + $0x168] sm:$0xf]
    %v168 = vld [vmem:[#allocation5 + $0x16c] sm:$0xf]
    %v169 = vld [vmem:[#allocation5 + $0x170] sm:$0xf]
    %v170 = vld [vmem:[#allocation5 + $0x174] sm:$0xf]
    %v171 = vld [vmem:[#allocation5 + $0x178] sm:$0xf]
    %v172 = vld [vmem:[#allocation5 + $0x17c] sm:$0xf]
    %v173 = vld [vmem:[#allocation5 + $0x180] sm:$0xf]
    %v174 = vld [vmem:[#allocation5 + $0x184] sm:$0xf]
    %v175 = vld [vmem:[%s2] sm:$0x1]
    %v177 = vperm.slane %v175, 0
    %180 = vst [vmem:[#allocation1] ss:$9 sm:$0xff] %v69
    %s182 = scalar_lea.vmem [#allocation1], 1
    %183 = vst [vmem:[%s182] ss:$9 sm:$0xff] %v70
    %s185 = scalar_lea.vmem [#allocation1], 2
    %186 = vst [vmem:[%s185] ss:$9 sm:$0xff] %v71
    %s188 = scalar_lea.vmem [#allocation1], 3
    %189 = vst [vmem:[%s188] ss:$9 sm:$0xff] %v72
    %s191 = scalar_lea.vmem [#allocation1], 4
    %192 = vst [vmem:[%s191] ss:$9 sm:$0xff] %v73
    %s194 = scalar_lea.vmem [#allocation1], 5
    %195 = vst [vmem:[%s194] ss:$9 sm:$0xff] %v74
    %s197 = scalar_lea.vmem [#allocation1], 6
    %198 = vst [vmem:[%s197] ss:$9 sm:$0xff] %v75
    %s200 = scalar_lea.vmem [#allocation1], 7
    %201 = vst [vmem:[%s200] ss:$9 sm:$0xff] %v76
    %v202 = vld [vmem:[#allocation1] sm:$0xff]
    %v203 = vld [vmem:[#allocation1 + $0x9] sm:$0xff]
    %v204 = vld [vmem:[#allocation1 + $0x12] sm:$0xff]
    %v205 = vld [vmem:[#allocation1 + $0x1b] sm:$0xff]
    %v206 = vld [vmem:[#allocation1 + $0x24] sm:$0xff]
    %v207 = vld [vmem:[#allocation1 + $0x2d] sm:$0xff]
    %v208 = vld [vmem:[#allocation1 + $0x36] sm:$0xff]
    %v313 = vunpack.c.l.b16 %v77
    %v314 = vunpack.c.l.b16 %v78
    %v315 = vunpack.c.l.b16 %v79
    %v316 = vunpack.c.l.b16 %v80
    %v317 = vunpack.c.l.b16 %v81
    %v318 = vunpack.c.l.b16 %v82
    %v319 = vunpack.c.l.b16 %v83
    %v320 = vunpack.c.l.b16 %v84
    %v321 = vunpack.c.l.b16 %v85
    %v322 = vunpack.c.l.b16 %v86
    %v323 = vunpack.c.l.b16 %v87
    %v324 = vunpack.c.l.b16 %v88
    %v325 = vunpack.c.l.b16 %v89
    %v326 = vunpack.c.l.b16 %v90
    %v327 = vunpack.c.l.b16 %v91
    %v328 = vunpack.c.l.b16 %v92
    %v329 = vunpack.c.l.b16 %v93
    %v330 = vunpack.c.l.b16 %v94
    %v331 = vunpack.c.l.b16 %v95
    %v332 = vunpack.c.l.b16 %v96
    %v333 = vunpack.c.l.b16 %v97
    %v334 = vunpack.c.l.b16 %v98
    %v335 = vunpack.c.l.b16 %v99
    %v336 = vunpack.c.l.b16 %v100
    %v337 = vunpack.c.l.b16 %v101
    %v338 = vunpack.c.l.b16 %v102
    %v339 = vunpack.c.l.b16 %v103
    %v340 = vunpack.c.l.b16 %v104
    %v341 = vunpack.c.l.b16 %v105
    %v342 = vunpack.c.l.b16 %v106
    %v343 = vunpack.c.l.b16 %v107
    %v344 = vunpack.c.l.b16 %v108
    %v345 = vunpack.c.l.b16 %v109
    %v346 = vunpack.c.l.b16 %v110
    %v347 = vunpack.c.l.b16 %v111
    %v348 = vunpack.c.l.b16 %v112
    %v349 = vunpack.c.l.b16 %v113
    %v350 = vunpack.c.l.b16 %v114
    %v351 = vunpack.c.l.b16 %v115
    %v352 = vunpack.c.l.b16 %v116
    %v353 = vunpack.c.l.b16 %v117
    %v354 = vunpack.c.l.b16 %v118
    %v355 = vunpack.c.l.b16 %v119
    %v356 = vunpack.c.l.b16 %v120
    %v357 = vunpack.c.l.b16 %v121
    %v358 = vunpack.c.l.b16 %v122
    %v359 = vunpack.c.l.b16 %v123
    %v360 = vunpack.c.l.b16 %v124
    %v361 = vunpack.c.l.b16 %v125
    %v362 = vunpack.c.l.b16 %v126
    %v363 = vunpack.c.l.b16 %v127
    %v364 = vunpack.c.l.b16 %v128
    %v365 = vunpack.c.l.b16 %v129
    %v366 = vunpack.c.l.b16 %v130
    %v367 = vunpack.c.l.b16 %v131
    %v368 = vunpack.c.l.b16 %v132
    %v369 = vunpack.c.l.b16 %v133
    %v370 = vunpack.c.l.b16 %v134
    %v371 = vunpack.c.l.b16 %v135
    %v372 = vunpack.c.l.b16 %v136
    %v373 = vunpack.c.l.b16 %v137
    %v374 = vunpack.c.l.b16 %v138
    %v375 = vunpack.c.l.b16 %v139
    %v376 = vunpack.c.l.b16 %v140
    %v377 = vunpack.c.l.b16 %v141
    %v378 = vunpack.c.l.b16 %v142
    %v379 = vunpack.c.l.b16 %v143
    %v380 = vunpack.c.l.b16 %v144
    %v381 = vunpack.c.l.b16 %v145
    %v382 = vunpack.c.l.b16 %v146
    %v383 = vunpack.c.l.b16 %v147
    %v384 = vunpack.c.l.b16 %v148
    %v385 = vunpack.c.l.b16 %v149
    %v386 = vunpack.c.l.b16 %v150
    %v387 = vunpack.c.l.b16 %v151
    %v388 = vunpack.c.l.b16 %v152
    %v389 = vunpack.c.l.b16 %v153
    %v390 = vunpack.c.l.b16 %v154
    %v391 = vunpack.c.l.b16 %v155
    %v392 = vunpack.c.l.b16 %v156
    %v393 = vunpack.c.l.b16 %v157
    %v394 = vunpack.c.l.b16 %v158
    %v395 = vunpack.c.l.b16 %v159
    %v396 = vunpack.c.l.b16 %v160
    %v397 = vunpack.c.l.b16 %v161
    %v398 = vunpack.c.l.b16 %v162
    %v399 = vunpack.c.l.b16 %v163
    %v400 = vunpack.c.l.b16 %v164
    %v401 = vunpack.c.l.b16 %v165
    %v402 = vunpack.c.l.b16 %v166
    %v403 = vunpack.c.l.b16 %v167
    %v404 = vunpack.c.l.b16 %v168
    %v405 = vunpack.c.l.b16 %v169
    %v406 = vunpack.c.l.b16 %v170
    %v407 = vunpack.c.l.b16 %v171
    %v408 = vunpack.c.l.b16 %v172
    %v409 = vunpack.c.l.b16 %v173
    %v410 = vunpack.c.l.b16 %v174
    %v411 = vpack.c.b16 %v314, %v313
    %v412 = vpack.c.b16 %v316, %v315
    %v413 = vpack.c.b16 %v318, %v317
    %v414 = vpack.c.b16 %v320, %v319
    %v415 = vpack.c.b16 %v322, %v321
    %v416 = vpack.c.b16 %v324, %v323
    %v417 = vpack.c.b16 %v326, %v325
    %v418 = vpack.c.b16 %v328, %v327
    %v419 = vpack.c.b16 %v330, %v329
    %v420 = vpack.c.b16 %v332, %v331
    %v421 = vpack.c.b16 %v334, %v333
    %v422 = vpack.c.b16 %v336, %v335
    %v423 = vpack.c.b16 %v338, %v337
    %v424 = vpack.c.b16 %v340, %v339
    %v425 = vpack.c.b16 %v342, %v341
    %v426 = vpack.c.b16 %v344, %v343
    %v427 = vpack.c.b16 %v346, %v345
    %v428 = vpack.c.b16 %v348, %v347
    %v429 = vpack.c.b16 %v350, %v349
    %v430 = vpack.c.b16 %v352, %v351
    %v431 = vpack.c.b16 %v354, %v353
    %v432 = vpack.c.b16 %v356, %v355
    %v433 = vpack.c.b16 %v358, %v357
    %v434 = vpack.c.b16 %v360, %v359
    %v435 = vpack.c.b16 %v362, %v361
    %v436 = vpack.c.b16 %v364, %v363
    %v437 = vpack.c.b16 %v366, %v365
    %v438 = vpack.c.b16 %v368, %v367
    %v439 = vpack.c.b16 %v370, %v369
    %v440 = vpack.c.b16 %v372, %v371
    %v441 = vpack.c.b16 %v374, %v373
    %v442 = vpack.c.b16 %v376, %v375
    %v443 = vpack.c.b16 %v378, %v377
    %v444 = vpack.c.b16 %v380, %v379
    %v445 = vpack.c.b16 %v382, %v381
    %v446 = vpack.c.b16 %v384, %v383
    %v447 = vpack.c.b16 %v386, %v385
    %v448 = vpack.c.b16 %v388, %v387
    %v449 = vpack.c.b16 %v390, %v389
    %v450 = vpack.c.b16 %v392, %v391
    %v451 = vpack.c.b16 %v394, %v393
    %v452 = vpack.c.b16 %v396, %v395
    %v453 = vpack.c.b16 %v398, %v397
    %v454 = vpack.c.b16 %v400, %v399
    %v455 = vpack.c.b16 %v402, %v401
    %v456 = vpack.c.b16 %v404, %v403
    %v457 = vpack.c.b16 %v406, %v405
    %v458 = vpack.c.b16 %v408, %v407
    %v459 = vpack.c.b16 %v410, %v409
    %vm509 = vcmask 130048
    %v510 = vsel %vm509, %v208, 0
    %512 = vmatpush.bf16.msra.mxu0 %v418
    %513 = vmatpush.bf16.msra.mxu0 %v417
    %514 = vmatpush.bf16.msra.mxu0 %v416
    %515 = vmatpush.bf16.msra.mxu0 %v415
    %516 = vmatpush.bf16.msra.mxu0 %v414
    %517 = vmatpush.bf16.msra.mxu0 %v413
    %518 = vmatpush.bf16.msra.mxu0 %v412
    %519 = vmatpush.bf16.msra.mxu0 %v411
    %520 = vmatmul.bf16.gmra.mxu0 %v202
    %v521 = vpop.f32.mrf.mxu0
    %v522 = vadd.f32 %v177, %v521
    %v523 = vpop.f32.mrf.mxu0
    %v524 = vadd.f32 %v177, %v523
    %525 = vdwg.mxu0
    %526 = vmatpush.bf16.msra.mxu0 %v426
    %527 = vmatpush.bf16.msra.mxu0 %v425
    %528 = vmatpush.bf16.msra.mxu0 %v424
    %529 = vmatpush.bf16.msra.mxu0 %v423
    %530 = vmatpush.bf16.msra.mxu0 %v422
    %531 = vmatpush.bf16.msra.mxu0 %v421
    %532 = vmatpush.bf16.msra.mxu0 %v420
    %533 = vmatpush.bf16.msra.mxu0 %v419
    %534 = vmatmul.bf16.gmra.mxu0 %v203
    %v535 = vpop.f32.mrf.mxu0
    %v536 = vadd.f32 %v522, %v535
    %v537 = vpop.f32.mrf.mxu0
    %v538 = vadd.f32 %v524, %v537
    %539 = vdwg.mxu0
    %540 = vmatpush.bf16.msra.mxu0 %v434
    %541 = vmatpush.bf16.msra.mxu0 %v433
    %542 = vmatpush.bf16.msra.mxu0 %v432
    %543 = vmatpush.bf16.msra.mxu0 %v431
    %544 = vmatpush.bf16.msra.mxu0 %v430
    %545 = vmatpush.bf16.msra.mxu0 %v429
    %546 = vmatpush.bf16.msra.mxu0 %v428
    %547 = vmatpush.bf16.msra.mxu0 %v427
    %548 = vmatmul.bf16.gmra.mxu0 %v204
    %v549 = vpop.f32.mrf.mxu0
    %v550 = vadd.f32 %v536, %v549
    %v551 = vpop.f32.mrf.mxu0
    %v552 = vadd.f32 %v538, %v551
    %553 = vdwg.mxu0
    %554 = vmatpush.bf16.msra.mxu0 %v442
    %555 = vmatpush.bf16.msra.mxu0 %v441
    %556 = vmatpush.bf16.msra.mxu0 %v440
    %557 = vmatpush.bf16.msra.mxu0 %v439
    %558 = vmatpush.bf16.msra.mxu0 %v438
    %559 = vmatpush.bf16.msra.mxu0 %v437
    %560 = vmatpush.bf16.msra.mxu0 %v436
    %561 = vmatpush.bf16.msra.mxu0 %v435
    %562 = vmatmul.bf16.gmra.mxu0 %v205
    %v563 = vpop.f32.mrf.mxu0
    %v564 = vadd.f32 %v550, %v563
    %v565 = vpop.f32.mrf.mxu0
    %v566 = vadd.f32 %v552, %v565
    %567 = vdwg.mxu0
    %568 = vmatpush.bf16.msra.mxu0 %v450
    %569 = vmatpush.bf16.msra.mxu0 %v449
    %570 = vmatpush.bf16.msra.mxu0 %v448
    %571 = vmatpush.bf16.msra.mxu0 %v447
    %572 = vmatpush.bf16.msra.mxu0 %v446
    %573 = vmatpush.bf16.msra.mxu0 %v445
    %574 = vmatpush.bf16.msra.mxu0 %v444
    %575 = vmatpush.bf16.msra.mxu0 %v443
    %576 = vmatmul.bf16.gmra.mxu0 %v206
    %v577 = vpop.f32.mrf.mxu0
    %v578 = vadd.f32 %v564, %v577
    %v579 = vpop.f32.mrf.mxu0
    %v580 = vadd.f32 %v566, %v579
    %581 = vdwg.mxu0
    %582 = vmatpush.bf16.msra.mxu0 %v458
    %583 = vmatpush.bf16.msra.mxu0 %v457
    %584 = vmatpush.bf16.msra.mxu0 %v456
    %585 = vmatpush.bf16.msra.mxu0 %v455
    %586 = vmatpush.bf16.msra.mxu0 %v454
    %587 = vmatpush.bf16.msra.mxu0 %v453
    %588 = vmatpush.bf16.msra.mxu0 %v452
    %589 = vmatpush.bf16.msra.mxu0 %v451
    %590 = vmatmul.bf16.gmra.mxu0 %v207
    %v591 = vpop.f32.mrf.mxu0
    %v592 = vadd.f32 %v578, %v591
    %v593 = vpop.f32.mrf.mxu0
    %v594 = vadd.f32 %v580, %v593
    %595 = vdwg.mxu0
    %596 = vmatpush.bf16.msra.mxu0 0
    %597 = vmatpush.bf16.msra.mxu0 0
    %598 = vmatpush.bf16.msra.mxu0 0
    %599 = vmatpush.bf16.msra.mxu0 0
    %600 = vmatpush.bf16.msra.mxu0 0
    %601 = vmatpush.bf16.msra.mxu0 0
    %602 = vmatpush.bf16.msra.mxu0 0
    %603 = vmatpush.bf16.msra.mxu0 %v459
    %604 = vmatmul.bf16.gmra.mxu0 %v510
    %v605 = vpop.f32.mrf.mxu0
    %v606 = vadd.f32 %v592, %v605
    %v607 = vpop.f32.mrf.mxu0
    %v608 = vadd.f32 %v594, %v607
    %609 = vdwg.mxu0
    %v610 = vmax.f32 %v606, 0.0
    %v611 = vmax.f32 %v608, 0.0
    %v612 = vpack.c.bf16 %v611, %v610
    %v613 = vld [vmem:[#allocation7] sm:$0xf]
    %v614 = vld [vmem:[#allocation7 + $0x4] sm:$0xf]
    %v615 = vld [vmem:[#allocation7 + $0x8] sm:$0xf]
    %v616 = vld [vmem:[#allocation7 + $0xc] sm:$0xf]
    %v617 = vld [vmem:[#allocation7 + $0x10] sm:$0xf]
    %v618 = vld [vmem:[#allocation7 + $0x14] sm:$0xf]
    %v619 = vld [vmem:[#allocation7 + $0x18] sm:$0xf]
    %v620 = vld [vmem:[#allocation7 + $0x1c] sm:$0xf]
    %v621 = vld [vmem:[#allocation7 + $0x20] sm:$0xf]
    %v622 = vld [vmem:[#allocation7 + $0x24] sm:$0xf]
    %v623 = vld [vmem:[#allocation7 + $0x28] sm:$0xf]
    %v624 = vld [vmem:[#allocation7 + $0x2c] sm:$0xf]
    %v625 = vld [vmem:[#allocation7 + $0x30] sm:$0xf]
    %v626 = vld [vmem:[#allocation7 + $0x34] sm:$0xf]
    %v627 = vld [vmem:[#allocation7 + $0x38] sm:$0xf]
    %v628 = vld [vmem:[#allocation7 + $0x3c] sm:$0xf]
    %v629 = vld [vmem:[%s4] sm:$0x1]
    %v631 = vperm.slane %v629, 0
    %v649 = vunpack.c.l.b16 %v613
    %v650 = vunpack.c.l.b16 %v614
    %v651 = vunpack.c.l.b16 %v615
    %v652 = vunpack.c.l.b16 %v616
    %v653 = vunpack.c.l.b16 %v617
    %v654 = vunpack.c.l.b16 %v618
    %v655 = vunpack.c.l.b16 %v619
    %v656 = vunpack.c.l.b16 %v620
    %v657 = vunpack.c.l.b16 %v621
    %v658 = vunpack.c.l.b16 %v622
    %v659 = vunpack.c.l.b16 %v623
    %v660 = vunpack.c.l.b16 %v624
    %v661 = vunpack.c.l.b16 %v625
    %v662 = vunpack.c.l.b16 %v626
    %v663 = vunpack.c.l.b16 %v627
    %v664 = vunpack.c.l.b16 %v628
    %v665 = vpack.c.b16 %v650, %v649
    %v666 = vpack.c.b16 %v652, %v651
    %v667 = vpack.c.b16 %v654, %v653
    %v668 = vpack.c.b16 %v656, %v655
    %v669 = vpack.c.b16 %v658, %v657
    %v670 = vpack.c.b16 %v660, %v659
    %v671 = vpack.c.b16 %v662, %v661
    %v672 = vpack.c.b16 %v664, %v663
    %681 = vmatpush.bf16.msra.mxu0 %v672
    %682 = vmatpush.bf16.msra.mxu0 %v671
    %683 = vmatpush.bf16.msra.mxu0 %v670
    %684 = vmatpush.bf16.msra.mxu0 %v669
    %685 = vmatpush.bf16.msra.mxu0 %v668
    %686 = vmatpush.bf16.msra.mxu0 %v667
    %687 = vmatpush.bf16.msra.mxu0 %v666
    %688 = vmatpush.bf16.msra.mxu0 %v665
    %689 = vmatmul.bf16.gmra.mxu0 %v612
    %v690 = vpop.f32.mrf.mxu0
    %v691 = vadd.f32 %v631, %v690
    %v692 = vpop.f32.mrf.mxu0
    %v693 = vadd.f32 %v631, %v692
    %694 = vdwg.mxu0
    %695 = vst [vmem:[#allocation8] sm:$0xff] %v691
    %696 = vst [vmem:[#allocation8 + $0x8] sm:$0xff] %v693
    // Predicated region
    $region34: #{tpu_custom_call.1} parent=1 // pred_check
      _
    $region35: #{tpu_custom_call.1} parent=1 // pred_check_branch
      %698 = sbr.rel (0) target = $region37
    $region36: #{tpu_custom_call.1} parent=1 // pred_region
      %700 = vsyncadd [#allocation4], 224
      %s701 = sshll.u32 [#allocation8], 4
      %s702 = int_to_ptr.vmem [resolvable:$true] %s701
      %s703 = sshll.u32 %s5, 4
      %s704 = int_to_ptr.hbm [resolvable:$true] %s703
      %709 = dma.vmem_to_hbm [thread:$0]  %s702, 32, %s704, [#allocation4], 32, 32, 2
    $region37: #{tpu_custom_call.1} parent=1 // pred_fallthru
      _
    // Predicated region
    $region38: #{tpu_custom_call.1} parent=1 // pred_check
      _
    $region39: #{tpu_custom_call.1} parent=1 // pred_check_branch
      %711 = sbr.rel (0) target = $region41
    $region40: #{tpu_custom_call.1} parent=1 // pred_region
      %713 = dma.done [#allocation4], 256
    $region41: #{tpu_custom_call.1} parent=1 // pred_fallthru
      _
    %714 = vsyncpa [#allocation3], 1
    %715 = vsyncpa [#allocation6], 1
    %716 = vsyncpa [#allocation4], 1

</llo_original>
